<compile_context>
chip_gen: v7x
topology: tpu7x:2x2x1
jax: 0.10.0
libtpu: 0.0.40
codegen_flags: <defaults>
</compile_context>

<pallas_src>
import numpy as np
import jax
import jax.numpy as jnp
from jax import lax
from jax.experimental import pallas as pl
from jax.experimental.pallas import tpu as pltpu

POOL_K = 5
POOL_S = 3
H_IN = W_IN = 14
H_OUT = W_OUT = 4                 # floor((14 - 5)/3) + 1 = 4
CONV_OUT = 128
FLAT = CONV_OUT * H_OUT * W_OUT   # 2048
FC1_OUT = 1024
BN_EPS = 1e-5
LANE = 128

SPATIAL_IN = H_IN * W_IN          # 196
SPATIAL_OUT = H_OUT * W_OUT       # 16

FC_TK = 512                       # fc1 K-tile: 2048/512 = 4 pipelined bf16 weight tiles (try 1024 on v7x)
M_TILE_MAX = 256                  # fc batch tile


def _pool_matrix_t():
    """(16, 196) matrix P_T with 1/25 at the positions of each 5x5 / stride-3 window."""
    p = np.zeros((SPATIAL_OUT, SPATIAL_IN), np.float32)
    inv = 1.0 / float(POOL_K * POOL_K)
    for i in range(H_OUT):
        for j in range(W_OUT):
            s = i * W_OUT + j
            for di in range(POOL_K):
                for dj in range(POOL_K):
                    p[s, (POOL_S * i + di) * W_IN + (POOL_S * j + dj)] = inv
    return p


def _head_kernel(x_ref, pt_ref, w_ref, b_ref, out_ref):
    """AvgPool(5,3) + 1x1 conv (BN folded) + ReLU for one tile of samples.

    x_ref:   (B_TILE, C, 196)   contiguous NCHW slab (H*W flattened)
    pt_ref:  (16, 196)          pooling matrix (transposed)
    w_ref:   (C, 128)           1x1 conv weight with BN scale folded in (f32)
    b_ref:   (1, 128)           folded conv-bias + BN bias (f32)
    out_ref: (B_TILE*16, 128)   lane-dense head activations (bf16), rows = b*16 + s
    """
    bt, c = x_ref.shape[0], x_ref.shape[1]
    # Pool + "channels onto lanes" in one batched MXU contraction (flash-attention-style
    # 'bqd,bkd->bqk' form; no structural zeros, no XLU transpose):
    #   pooled[b, s, c] = sum_p P_T[s, p] * x[b, c, p]
    ptb = jnp.broadcast_to(pt_ref[...], (bt,) + tuple(pt_ref.shape))        # (B, 16, 196)
    pooled = jnp.einsum('bsp,bcp->bsc', ptb, x_ref[...],
                        preferred_element_type=jnp.float32)                 # (B, 16, C)
    pooled2 = pooled.reshape(bt * SPATIAL_OUT, c)                           # layout-preserving merge
    y = jnp.dot(pooled2, w_ref[...], preferred_element_type=jnp.float32) + b_ref[...]
    out_ref[...] = jnp.maximum(y, 0.0).astype(out_ref.dtype)


def _fc_kernel(x_ref, w1_ref, b1_ref, w2_ref, b2_ref, out_ref, acc_ref):
    """Batch- and K-tiled fc1 (+ReLU, eval-mode dropout) + fc2 (class dim padded to 128 lanes).

    x_ref: (M_TILE, FC_TK) bf16   w1_ref: (FC_TK, 1024) bf16   w2_ref: (1024, CP) bf16
    acc_ref: (M_TILE, 1024) f32 scratch, persistent across the K grid axis.
    """
    k = pl.program_id(1)

    @pl.when(k == 0)
    def _():
        acc_ref[...] = jnp.zeros_like(acc_ref)

    acc_ref[...] += jnp.dot(x_ref[...], w1_ref[...], preferred_element_type=jnp.float32)

    @pl.when(k == pl.num_programs(1) - 1)
    def _():
        h = jnp.maximum(acc_ref[...] + b1_ref[...], 0.0)
        # TODO(synk): nn.Dropout(p=0.7) is identity in eval mode; training-mode random masking not implemented.
        out_ref[...] = (jnp.dot(h.astype(jnp.bfloat16), w2_ref[...],
                                preferred_element_type=jnp.float32) + b2_ref[...])


def _vmem_limit(est_bytes):
    """Explicit scoped-VMEM limit: 2x the estimated live tile bytes, clamped to [16, 48] MiB."""
    return int(min(max(2 * est_bytes, 16 * 1024 * 1024), 48 * 1024 * 1024))


def aux_forward(x, params):
    N, C, H, W = x.shape
    assert (H, W) == (H_IN, W_IN), "AUX requires 14x14 input (fc1.in_features == 2048)"
    class_num = params["fc2_w"].shape[1]
    cp = max(LANE, -(-class_num // LANE) * LANE)          # class dim padded to a lane multiple

    b_tile = 16 if N >= 32 else 8                         # 256-row head matmuls for big batches
    g = -(-N // b_tile)
    n_pad = g * b_tile

    # ---- weight prep (host/XLA side, done once per call) ----
    scale = params["bn_gamma"] / jnp.sqrt(params["bn_var"] + BN_EPS)                  # (128,)
    wct = params["conv_w"].reshape(CONV_OUT, C).T * scale[None, :]                    # (C, 128)
    bias = (params["bn_beta"] + (params["conv_b"] - params["bn_mean"]) * scale
            ).reshape(1, CONV_OUT)                                                    # (1, 128)

    pt = jnp.asarray(_pool_matrix_t())                                                # (16, 196)

    # Head emits flat index k = s*128 + c; permute fc1_w rows from PyTorch's c*16 + s order,
    # and stream fc weights as bf16 (accumulation stays f32 inside the kernel).
    w1p = params["fc1_w"].reshape(CONV_OUT, SPATIAL_OUT, FC1_OUT)
    w1p = w1p.transpose(1, 0, 2).reshape(FLAT, FC1_OUT).astype(jnp.bfloat16)          # (2048, 1024)
    b1 = params["fc1_b"].reshape(1, FC1_OUT)
    w2p = (jnp.zeros((FC1_OUT, cp), jnp.float32)
           .at[:, :class_num].set(params["fc2_w"]).astype(jnp.bfloat16))
    b2p = jnp.zeros((1, cp), jnp.float32).at[0, :class_num].set(params["fc2_b"])

    # ---- input prep: NCHW -> (n_pad, C, 196); no NHWC transpose, blocks are contiguous slabs ----
    if n_pad != N:
        x = jnp.pad(x, ((0, n_pad - N), (0, 0), (0, 0), (0, 0)))
    xr = x.reshape(n_pad, C, SPATIAL_IN)

    head_rows = b_tile * SPATIAL_OUT
    head_vmem = 2 * (b_tile * C * SPATIAL_IN * 4 + SPATIAL_OUT * SPATIAL_IN * 4
                     + C * CONV_OUT * 4 + CONV_OUT * 4 + head_rows * CONV_OUT * 2)
    head_vmem += b_tile * SPATIAL_OUT * (SPATIAL_IN + C + 2 * CONV_OUT) * 4           # intermediates
    head_cost = pl.CostEstimate(
        flops=int(2 * n_pad * (C * SPATIAL_IN * SPATIAL_OUT + SPATIAL_OUT * C * CONV_OUT)),
        transcendentals=0,
        bytes_accessed=int(n_pad * C * SPATIAL_IN * 4 + n_pad * SPATIAL_OUT * CONV_OUT * 2
                           + C * CONV_OUT * 4 + SPATIAL_OUT * SPATIAL_IN * 4))

    head = pl.pallas_call(
        _head_kernel,
        out_shape=jax.ShapeDtypeStruct((n_pad * SPATIAL_OUT, CONV_OUT), jnp.bfloat16),
        grid_spec=pltpu.PrefetchScalarGridSpec(
            num_scalar_prefetch=0,
            grid=(g,),
            in_specs=[
                pl.BlockSpec((b_tile, C, SPATIAL_IN), lambda i: (i, 0, 0)),
                pl.BlockSpec((SPATIAL_OUT, SPATIAL_IN), lambda i: (0, 0)),
                pl.BlockSpec((C, CONV_OUT), lambda i: (0, 0)),
                pl.BlockSpec((1, CONV_OUT), lambda i: (0, 0)),
            ],
            out_specs=pl.BlockSpec((head_rows, CONV_OUT), lambda i: (i, 0)),
        ),
        compiler_params=pltpu.CompilerParams(
            dimension_semantics=("parallel",),
            vmem_limit_bytes=_vmem_limit(head_vmem)),
        cost_estimate=head_cost,
    )(xr, pt, wct, bias)

    # (n_pad*16, 128) -> (n_pad, 2048): identical row-major layout, free reshape.
    flat = head.reshape(n_pad, FLAT)

    m_tile = min(M_TILE_MAX, n_pad)                       # either == n_pad or 256 (multiple of 16)
    grid_m = pl.cdiv(n_pad, m_tile)
    fc_vmem = (2 * (m_tile * FC_TK * 2 + FC_TK * FC1_OUT * 2 + FC1_OUT * 4
                    + FC1_OUT * cp * 2 + cp * 4 + m_tile * cp * 4)
               + 2 * m_tile * FC1_OUT * 4)                                             # acc + h
    fc_cost = pl.CostEstimate(
        flops=int(2 * n_pad * (FLAT * FC1_OUT + FC1_OUT * cp)),
        transcendentals=0,
        bytes_accessed=int(n_pad * FLAT * 2 + grid_m * FLAT * FC1_OUT * 2
                           + FC1_OUT * cp * 2 + n_pad * cp * 4))

    out_pad = pl.pallas_call(
        _fc_kernel,
        out_shape=jax.ShapeDtypeStruct((n_pad, cp), jnp.float32),
        grid_spec=pltpu.PrefetchScalarGridSpec(
            num_scalar_prefetch=0,
            grid=(grid_m, FLAT // FC_TK),
            in_specs=[
                pl.BlockSpec((m_tile, FC_TK), lambda i, k: (i, k)),
                pl.BlockSpec((FC_TK, FC1_OUT), lambda i, k: (k, 0)),
                pl.BlockSpec((1, FC1_OUT), lambda i, k: (0, 0)),
                pl.BlockSpec((FC1_OUT, cp), lambda i, k: (0, 0)),
                pl.BlockSpec((1, cp), lambda i, k: (0, 0)),
            ],
            out_specs=pl.BlockSpec((m_tile, cp), lambda i, k: (i, 0)),
            scratch_shapes=[pltpu.VMEM((m_tile, FC1_OUT), jnp.float32)],
        ),
        compiler_params=pltpu.CompilerParams(
            dimension_semantics=("parallel", "arbitrary"),
            vmem_limit_bytes=_vmem_limit(fc_vmem)),
        cost_estimate=fc_cost,
    )(flat, w1p, b1, w2p, b2p)

    return out_pad[:N, :class_num]


def aux_reference(x, params):
    """Plain-JAX (f32) reference mirroring the PyTorch forward in eval mode."""
    pooled = lax.reduce_window(x, 0.0, lax.add, (1, 1, POOL_K, POOL_K),
                               (1, 1, POOL_S, POOL_S), "VALID") / float(POOL_K * POOL_K)
    w = params["conv_w"].reshape(CONV_OUT, -1)
    y = jnp.einsum("oc,nchw->nohw", w, pooled) + params["conv_b"][None, :, None, None]
    inv = 1.0 / jnp.sqrt(params["bn_var"] + BN_EPS)
    y = (y - params["bn_mean"][None, :, None, None]) * (params["bn_gamma"] * inv)[None, :, None, None] \
        + params["bn_beta"][None, :, None, None]
    y = jnp.maximum(y, 0.0)
    y = y.reshape(x.shape[0], -1)
    h = jnp.maximum(y @ params["fc1_w"] + params["fc1_b"], 0.0)
    return h @ params["fc2_w"] + params["fc2_b"]


if __name__ == "__main__":
    N, C_IN, CLASS_NUM = 2, 8, 10
    keys = jax.random.split(jax.random.PRNGKey(0), 10)
    x = jax.random.normal(keys[0], (N, C_IN, H_IN, W_IN), jnp.float32)
    params = {
        "conv_w": 0.05 * jax.random.normal(keys[1], (CONV_OUT, C_IN, 1, 1), jnp.float32),
        "conv_b": 0.05 * jax.random.normal(keys[2], (CONV_OUT,), jnp.float32),
        "bn_gamma": 1.0 + 0.1 * jax.random.normal(keys[3], (CONV_OUT,), jnp.float32),
        "bn_beta": 0.1 * jax.random.normal(keys[4], (CONV_OUT,), jnp.float32),
        "bn_mean": 0.1 * jax.random.normal(keys[5], (CONV_OUT,), jnp.float32),
        "bn_var": 1.0 + 0.1 * jnp.abs(jax.random.normal(keys[6], (CONV_OUT,), jnp.float32)),
        "fc1_w": 0.02 * jax.random.normal(keys[7], (FLAT, FC1_OUT), jnp.float32),
        "fc1_b": 0.02 * jax.random.normal(keys[8], (FC1_OUT,), jnp.float32),
        "fc2_w": 0.02 * jax.random.normal(keys[9], (FC1_OUT, CLASS_NUM), jnp.float32),
        "fc2_b": jnp.zeros((CLASS_NUM,), jnp.float32),
    }

    out = jax.block_until_ready(aux_forward(x, params))
    ref = aux_reference(x, params)
    assert out.shape == (N, CLASS_NUM)
    # fc1/fc2 weights and the head->fc activations are streamed as bf16 (f32 accumulation),
    # so allow a slightly wider tolerance than a pure-f32 pipeline.
    assert jnp.allclose(out, ref, atol=2e-3, rtol=2e-3), "mismatch vs JAX reference"
    print("KERNEL_OK")
</pallas_src>

<mosaic_0001>
module attributes {stable_mosaic.version = 11 : i64} {
  func.func @_head_kernel(%arg0: i32, %arg1: memref<8x8x196xf32, #tpu.memory_space<vmem>>, %arg2: memref<16x196xf32, #tpu.memory_space<vmem>>, %arg3: memref<8x128xf32, #tpu.memory_space<vmem>>, %arg4: memref<1x128xf32, #tpu.memory_space<vmem>>, %arg5: memref<128x128xbf16, #tpu.memory_space<vmem>>) attributes {dimension_semantics = [#tpu.dimension_semantics<parallel>], iteration_bounds = array<i64: 1>, scalar_prefetch = 0 : i64, scratch_operands = 0 : i64, tpu.core_type = #tpu.core_type<tc>, window_params = [{transform_indices = @transform_0, window_bounds = array<i64: 8, 8, 196>}, {pipeline_mode = #tpu.pipeline_mode<synchronous>, transform_indices = @transform_1, window_bounds = array<i64: 16, 196>}, {pipeline_mode = #tpu.pipeline_mode<synchronous>, transform_indices = @transform_2, window_bounds = array<i64: 8, 128>}, {pipeline_mode = #tpu.pipeline_mode<synchronous>, transform_indices = @transform_3, window_bounds = array<i64: 1, 128>}, {transform_indices = @transform_4, window_bounds = array<i64: 128, 128>}]} {
    %c0 = arith.constant 0 : index
    %c0_0 = arith.constant 0 : index
    %0 = vector.load %arg2[%c0, %c0_0] : memref<16x196xf32, #tpu.memory_space<vmem>>, vector<16x196xf32>
    %1 = vector.shape_cast %0 : vector<16x196xf32> to vector<1x16x196xf32>
    %2 = vector.broadcast %1 : vector<1x16x196xf32> to vector<8x16x196xf32>
    %c0_1 = arith.constant 0 : index
    %c0_2 = arith.constant 0 : index
    %c0_3 = arith.constant 0 : index
    %3 = vector.load %arg1[%c0_1, %c0_2, %c0_3] : memref<8x8x196xf32, #tpu.memory_space<vmem>>, vector<8x8x196xf32>
    "tpu.trace_start"() <{level = 10 : i32, message = "bsp,bcp->bsc"}> : () -> ()
    %cst = arith.constant dense<0.000000e+00> : vector<8x16x8xf32>
    %4 = tpu.matmul %2, %3, %cst {dimension_numbers = #tpu.dot_dimension_numbers<[2], [2], [1], [1], [0, 0, 0, 1, 1, 1], [0], [0]>} : vector<8x16x196xf32>, vector<8x8x196xf32>, vector<8x16x8xf32> -> vector<8x16x8xf32>
    "tpu.trace_stop"() : () -> ()
    %5 = vector.shape_cast %4 : vector<8x16x8xf32> to vector<128x8xf32>
    %c0_4 = arith.constant 0 : index
    %c0_5 = arith.constant 0 : index
    %6 = vector.load %arg3[%c0_4, %c0_5] : memref<8x128xf32, #tpu.memory_space<vmem>>, vector<8x128xf32>
    %cst_6 = arith.constant dense<0.000000e+00> : vector<128x128xf32>
    %7 = tpu.matmul %5, %6, %cst_6 {dimension_numbers = #tpu.dot_dimension_numbers<[1], [0], [0], [1], [0, 0, 1, 1], [], []>} : vector<128x8xf32>, vector<8x128xf32>, vector<128x128xf32> -> vector<128x128xf32>
    %c0_7 = arith.constant 0 : index
    %c0_8 = arith.constant 0 : index
    %8 = vector.load %arg4[%c0_7, %c0_8] : memref<1x128xf32, #tpu.memory_space<vmem>>, vector<1x128xf32>
    %9 = vector.broadcast %8 : vector<1x128xf32> to vector<128x128xf32>
    %10 = arith.addf %7, %9 : vector<128x128xf32>
    %cst_9 = arith.constant 0.000000e+00 : f32
    %11 = vector.broadcast %cst_9 : f32 to vector<128x128xf32>
    %12 = arith.maximumf %10, %11 : vector<128x128xf32>
    %13 = arith.truncf %12 : vector<128x128xf32> to vector<128x128xbf16>
    %c0_10 = arith.constant 0 : index
    %c0_11 = arith.constant 0 : index
    %14 = vector.load %arg5[%c0_10, %c0_11] : memref<128x128xbf16, #tpu.memory_space<vmem>>, vector<128x128xbf16>
    tpu.vector_store %arg5[%c0_10, %c0_11], %13 {strides = array<i32>} : memref<128x128xbf16, #tpu.memory_space<vmem>>, vector<128x128xbf16>,
    return
  }
  func.func @transform_0(%arg0: i32) -> (i32, i32, i32) {
    %c0_i32 = arith.constant 0 : i32
    %c0_i32_0 = arith.constant 0 : i32
    %c0_i32_1 = arith.constant 0 : i32
    return %arg0, %c0_i32, %c0_i32_0 : i32, i32, i32
  }
  func.func @transform_1(%arg0: i32) -> (i32, i32) {
    %c0_i32 = arith.constant 0 : i32
    %c0_i32_0 = arith.constant 0 : i32
    %c0_i32_1 = arith.constant 0 : i32
    return %c0_i32, %c0_i32_0 : i32, i32
  }
  func.func @transform_2(%arg0: i32) -> (i32, i32) {
    %c0_i32 = arith.constant 0 : i32
    %c0_i32_0 = arith.constant 0 : i32
    %c0_i32_1 = arith.constant 0 : i32
    return %c0_i32, %c0_i32_0 : i32, i32
  }
  func.func @transform_3(%arg0: i32) -> (i32, i32) {
    %c0_i32 = arith.constant 0 : i32
    %c0_i32_0 = arith.constant 0 : i32
    %c0_i32_1 = arith.constant 0 : i32
    return %c0_i32, %c0_i32_0 : i32, i32
  }
  func.func @transform_4(%arg0: i32) -> (i32, i32) {
    %c0_i32 = arith.constant 0 : i32
    %c0_i32_0 = arith.constant 0 : i32
    return %arg0, %c0_i32 : i32, i32
  }
}

</mosaic_0001>

<llo_original>
// kernel: tpu_custom_call.1
$region0: #{tpu_custom_call.1}
  #allocation0 [shape = 'u32[]', space=smem, size = 0x4, offset = 0x4, fixed_abs, tag = 'smem constant byte address 0x4 - core index']
  #allocation1 [shape = 'u32[144,128]{1,0:T(1,128)}', space=vmem, size = 0x12000, scoped, tag = 'internal scratch']
  %s0 = inlined_call_operand.hbm [shape: f32[8,8,196], index: 0, kind: input, shape index: {}]
  %s1 = inlined_call_operand.hbm [shape: f32[16,196], index: 1, kind: input, shape index: {}]
  %s2 = inlined_call_operand.hbm [shape: f32[8,128], index: 2, kind: input, shape index: {}]
  %s3 = inlined_call_operand.vmem [shape: f32[1,128], index: 3, kind: input, shape index: {}]
  %s4 = inlined_call_operand.hbm [shape: bf16[128,128], index: 4, kind: output, shape index: {}]
  %s5 = sld [smem:[#allocation0]]
  $region38: #{tpu_custom_call.1} parent=0
    _
  %s7 = ssub.s32 1, %s5
  %s8 = scalar_select 0, %s7, %s5
  $region1: #{tpu_custom_call.1} parent=0
    #allocation2 [shape = 'u8[65536]{0}', space=vmem, size = 0x10000, scoped, tag = 'input window, operand 0, single buffered']
    #allocation3 [shape = 's32[1]{0}', space=sflag, size = 0x4, scoped, tag = 'scoped memory for tpu_custom_call.1']
    #allocation4 [shape = 's32[1]{0}', space=sflag, size = 0x4, scoped, tag = 'scoped memory for tpu_custom_call.1']
    #allocation5 [shape = 'u8[16384]{0}', space=vmem, size = 0x4000, scoped, tag = 'input window, operand 1, single buffered']
    #allocation6 [shape = 's32[1]{0}', space=sflag, size = 0x4, scoped, tag = 'scoped memory for tpu_custom_call.1']
    #allocation7 [shape = 'u8[4096]{0}', space=vmem, size = 0x1000, scoped, tag = 'input window, operand 2, single buffered']
    #allocation8 [shape = 'u8[32768]{0}', space=vmem, size = 0x8000, scoped, tag = 'output window, operand 0, single buffered']
    %9 = vsyncpa [#allocation3], 0
    %10 = vsyncpa [#allocation6], 0
    %11 = vsyncpa [#allocation4], 0
    // Predicated region
    $region2: #{tpu_custom_call.1} parent=1 // pred_check
      _
    $region3: #{tpu_custom_call.1} parent=1 // pred_check_branch
      %13 = sbr.rel (0) target = $region5
    $region4: #{tpu_custom_call.1} parent=1 // pred_region
      %s15 = ssub.s32 2048, 2048
      %16 = vsyncadd [#allocation3], %s15
      %s17 = sshll.u32 [#allocation2], 4
      %s18 = int_to_ptr.vmem [resolvable:$true] %s17
      %23 = dma.hbm_to_vmem [thread:$0]  %s0, 2048, %s18, [#allocation3], 256, 256, 16
    $region5: #{tpu_custom_call.1} parent=1 // pred_fallthru
      _
    // Predicated region
    $region6: #{tpu_custom_call.1} parent=1 // pred_check
      _
    $region7: #{tpu_custom_call.1} parent=1 // pred_check_branch
      %25 = sbr.rel (0) target = $region9
    $region8: #{tpu_custom_call.1} parent=1 // pred_region
      %s27 = ssub.s32 512, 512
      %28 = vsyncadd [#allocation6], %s27
      %s29 = sshll.u32 [#allocation5], 4
      %s30 = int_to_ptr.vmem [resolvable:$true] %s29
      %35 = dma.hbm_to_vmem [thread:$0]  %s1, 512, %s30, [#allocation6], 256, 256, 16
    $region9: #{tpu_custom_call.1} parent=1 // pred_fallthru
      _
    // Predicated region
    $region10: #{tpu_custom_call.1} parent=1 // pred_check
      _
    $region11: #{tpu_custom_call.1} parent=1 // pred_check_branch
      %37 = sbr.rel (0) target = $region13
    $region12: #{tpu_custom_call.1} parent=1 // pred_region
      %s39 = ssub.s32 128, 128
      %40 = vsyncadd [#allocation6], %s39
      %s42 = sshll.u32 [#allocation7], 4
      %s43 = int_to_ptr.vmem [resolvable:$true] %s42
      %45 = dma.hbm_to_vmem [thread:$0]  %s2, 128, %s43, [#allocation6]
    $region13: #{tpu_custom_call.1} parent=1 // pred_fallthru
      _
    // Predicated region
    $region14: #{tpu_custom_call.1} parent=1 // pred_check
      _
    $region15: #{tpu_custom_call.1} parent=1 // pred_check_branch
      %47 = sbr.rel (0) target = $region17
    $region16: #{tpu_custom_call.1} parent=1 // pred_region
      _
    $region17: #{tpu_custom_call.1} parent=1 // pred_fallthru
      _
    // Predicated region
    $region18: #{tpu_custom_call.1} parent=1 // pred_check
      _
    $region19: #{tpu_custom_call.1} parent=1 // pred_check_branch
      %49 = sbr.rel (0) target = $region21
    $region20: #{tpu_custom_call.1} parent=1 // pred_region
      %50 = dma.done [#allocation3], 2048
    $region21: #{tpu_custom_call.1} parent=1 // pred_fallthru
      _
    // Predicated region
    $region22: #{tpu_custom_call.1} parent=1 // pred_check
      _
    $region23: #{tpu_custom_call.1} parent=1 // pred_check_branch
      %52 = sbr.rel (0) target = $region25
    $region24: #{tpu_custom_call.1} parent=1 // pred_region
      %53 = dma.done [#allocation6], 512
    $region25: #{tpu_custom_call.1} parent=1 // pred_fallthru
      _
    // Predicated region
    $region26: #{tpu_custom_call.1} parent=1 // pred_check
      _
    $region27: #{tpu_custom_call.1} parent=1 // pred_check_branch
      %55 = sbr.rel (0) target = $region29
    $region28: #{tpu_custom_call.1} parent=1 // pred_region
      %56 = dma.done [#allocation6], 128
    $region29: #{tpu_custom_call.1} parent=1 // pred_fallthru
      _
    %v57 = vld [vmem:[#allocation5] sm:$0xff]
    %v58 = vld [vmem:[#allocation5 + $0x8] sm:$0xff]
    %v59 = vld [vmem:[#allocation5 + $0x10] sm:$0xff]
    %v60 = vld [vmem:[#allocation5 + $0x18] sm:$0xff]
    %v61 = vld [vmem:[#allocation2] sm:$0xff]
    %v62 = vld [vmem:[#allocation2 + $0x8] sm:$0xff]
    %v63 = vld [vmem:[#allocation2 + $0x10] sm:$0xff]
    %v64 = vld [vmem:[#allocation2 + $0x18] sm:$0xff]
    %v65 = vld [vmem:[#allocation2 + $0x20] sm:$0xff]
    %v66 = vld [vmem:[#allocation2 + $0x28] sm:$0xff]
    %v67 = vld [vmem:[#allocation2 + $0x30] sm:$0xff]
    %v68 = vld [vmem:[#allocation2 + $0x38] sm:$0xff]
    %v69 = vld [vmem:[#allocation2 + $0x40] sm:$0xff]
    %v70 = vld [vmem:[#allocation2 + $0x48] sm:$0xff]
    %v71 = vld [vmem:[#allocation2 + $0x50] sm:$0xff]
    %v72 = vld [vmem:[#allocation2 + $0x58] sm:$0xff]
    %v73 = vld [vmem:[#allocation2 + $0x60] sm:$0xff]
    %v74 = vld [vmem:[#allocation2 + $0x68] sm:$0xff]
    %v75 = vld [vmem:[#allocation2 + $0x70] sm:$0xff]
    %v76 = vld [vmem:[#allocation2 + $0x78] sm:$0xff]
    %vm77 = vcmask 556032
    %v79 = vsel %vm77, %v58, 0
    %v82 = vsel %vm77, %v60, 0
    %v85 = vsel %vm77, %v62, 0
    %87 = vmatprep.subr.mxu0 %v85
    %88 = vmatpush1.xpose.msra.mxu0 %v61
    %89 = vmatprep.subr.mxu0 0.0
    %90 = vmatpush1.xpose.msra.mxu0 0.0
    %91 = vmatprep.subr.mxu0 0.0
    %92 = vmatpush1.xpose.msra.mxu0 0.0
    %93 = vmatprep.subr.mxu0 0.0
    %94 = vmatpush1.xpose.msra.mxu0 0.0
    %95 = vmatprep.subr.mxu0 0.0
    %96 = vmatpush1.xpose.msra.mxu0 0.0
    %97 = vmatprep.subr.mxu0 0.0
    %98 = vmatpush1.xpose.msra.mxu0 0.0
    %99 = vmatprep.subr.mxu0 0.0
    %100 = vmatpush1.xpose.msra.mxu0 0.0
    %101 = vmatprep.subr.mxu0 0.0
    %102 = vmatpush1.xpose.msra.mxu0 0.0
    %103 = vmatprep.subr.mxu0 0.0
    %104 = vmatpush1.xpose.msra.mxu0 0.0
    %105 = vmatprep.subr.mxu0 0.0
    %106 = vmatpush1.xpose.msra.mxu0 0.0
    %107 = vmatprep.subr.mxu0 0.0
    %108 = vmatpush1.xpose.msra.mxu0 0.0
    %109 = vmatprep.subr.mxu0 0.0
    %110 = vmatpush1.xpose.msra.mxu0 0.0
    %111 = vmatprep.subr.mxu0 0.0
    %112 = vmatpush1.xpose.msra.mxu0 0.0
    %113 = vmatprep.subr.mxu0 0.0
    %114 = vmatpush1.xpose.msra.mxu0 0.0
    %115 = vmatprep.subr.mxu0 0.0
    %116 = vmatpush1.xpose.msra.mxu0 0.0
    %117 = vmatprep.subr.mxu0 0.0
    %118 = vmatpush1.xpose.msra.mxu0 0.0
    %119 = vmatprep.subr.mxu0 0.0
    %120 = vmatpush1.xpose.msra.mxu0 0.0
    %121 = vmatprep.subr.mxu0 0.0
    %122 = vmatpush1.xpose.msra.mxu0 0.0
    %123 = vmatprep.subr.mxu0 0.0
    %124 = vmatpush1.xpose.msra.mxu0 0.0
    %125 = vmatprep.subr.mxu0 0.0
    %126 = vmatpush1.xpose.msra.mxu0 0.0
    %127 = vmatprep.subr.mxu0 0.0
    %128 = vmatpush1.xpose.msra.mxu0 0.0
    %129 = vmatprep.subr.mxu0 0.0
    %130 = vmatpush1.xpose.msra.mxu0 0.0
    %131 = vmatprep.subr.mxu0 0.0
    %132 = vmatpush1.xpose.msra.mxu0 0.0
    %133 = vmatprep.subr.mxu0 0.0
    %134 = vmatpush1.xpose.msra.mxu0 0.0
    %135 = vmatprep.subr.mxu0 0.0
    %136 = vmatpush1.xpose.msra.mxu0 0.0
    %137 = vmatprep.subr.mxu0 0.0
    %138 = vmatpush1.xpose.msra.mxu0 0.0
    %139 = vmatprep.subr.mxu0 0.0
    %140 = vmatpush1.xpose.msra.mxu0 0.0
    %141 = vmatprep.subr.mxu0 0.0
    %142 = vmatpush1.xpose.msra.mxu0 0.0
    %143 = vmatprep.subr.mxu0 0.0
    %144 = vmatpush1.xpose.msra.mxu0 0.0
    %145 = vmatprep.subr.mxu0 0.0
    %146 = vmatpush1.xpose.msra.mxu0 0.0
    %147 = vmatprep.subr.mxu0 0.0
    %148 = vmatpush1.xpose.msra.mxu0 0.0
    %149 = vmatprep.subr.mxu0 0.0
    %150 = vmatpush1.xpose.msra.mxu0 0.0
    %151 = vmatprep.mubr.f32.mxu0 %v79
    %152 = vmatmul.mubr.f32.gmra.mrb[0].mxu0 %v57
    %v153 = vpop.f32.mrb[0].mxu0
    %v154 = vadd.f32 0.0, %v153
    %v155 = vpop.f32.mrb[0].mxu0
    %156 = vmatprep.mubr.f32.mxu0 %v82
    %157 = vmatmul.mubr.f32.gmra.mrb[0].mxu0 %v59
    %v158 = vpop.f32.mrb[0].mxu0
    %v159 = vadd.f32 0.0, %v158
    %v160 = vpop.f32.mrb[0].mxu0
    %161 = vdwg.mxu0
    %v163 = vsel %vm77, %v64, 0
    %165 = vmatprep.subr.mxu0 %v163
    %166 = vmatpush1.xpose.msra.mxu0 %v63
    %167 = vmatprep.subr.mxu0 0.0
    %168 = vmatpush1.xpose.msra.mxu0 0.0
    %169 = vmatprep.subr.mxu0 0.0
    %170 = vmatpush1.xpose.msra.mxu0 0.0
    %171 = vmatprep.subr.mxu0 0.0
    %172 = vmatpush1.xpose.msra.mxu0 0.0
    %173 = vmatprep.subr.mxu0 0.0
    %174 = vmatpush1.xpose.msra.mxu0 0.0
    %175 = vmatprep.subr.mxu0 0.0
    %176 = vmatpush1.xpose.msra.mxu0 0.0
    %177 = vmatprep.subr.mxu0 0.0
    %178 = vmatpush1.xpose.msra.mxu0 0.0
    %179 = vmatprep.subr.mxu0 0.0
    %180 = vmatpush1.xpose.msra.mxu0 0.0
    %181 = vmatprep.subr.mxu0 0.0
    %182 = vmatpush1.xpose.msra.mxu0 0.0
    %183 = vmatprep.subr.mxu0 0.0
    %184 = vmatpush1.xpose.msra.mxu0 0.0
    %185 = vmatprep.subr.mxu0 0.0
    %186 = vmatpush1.xpose.msra.mxu0 0.0
    %187 = vmatprep.subr.mxu0 0.0
    %188 = vmatpush1.xpose.msra.mxu0 0.0
    %189 = vmatprep.subr.mxu0 0.0
    %190 = vmatpush1.xpose.msra.mxu0 0.0
    %191 = vmatprep.subr.mxu0 0.0
    %192 = vmatpush1.xpose.msra.mxu0 0.0
    %193 = vmatprep.subr.mxu0 0.0
    %194 = vmatpush1.xpose.msra.mxu0 0.0
    %195 = vmatprep.subr.mxu0 0.0
    %196 = vmatpush1.xpose.msra.mxu0 0.0
    %197 = vmatprep.subr.mxu0 0.0
    %198 = vmatpush1.xpose.msra.mxu0 0.0
    %199 = vmatprep.subr.mxu0 0.0
    %200 = vmatpush1.xpose.msra.mxu0 0.0
    %201 = vmatprep.subr.mxu0 0.0
    %202 = vmatpush1.xpose.msra.mxu0 0.0
    %203 = vmatprep.subr.mxu0 0.0
    %204 = vmatpush1.xpose.msra.mxu0 0.0
    %205 = vmatprep.subr.mxu0 0.0
    %206 = vmatpush1.xpose.msra.mxu0 0.0
    %207 = vmatprep.subr.mxu0 0.0
    %208 = vmatpush1.xpose.msra.mxu0 0.0
    %209 = vmatprep.subr.mxu0 0.0
    %210 = vmatpush1.xpose.msra.mxu0 0.0
    %211 = vmatprep.subr.mxu0 0.0
    %212 = vmatpush1.xpose.msra.mxu0 0.0
    %213 = vmatprep.subr.mxu0 0.0
    %214 = vmatpush1.xpose.msra.mxu0 0.0
    %215 = vmatprep.subr.mxu0 0.0
    %216 = vmatpush1.xpose.msra.mxu0 0.0
    %217 = vmatprep.subr.mxu0 0.0
    %218 = vmatpush1.xpose.msra.mxu0 0.0
    %219 = vmatprep.subr.mxu0 0.0
    %220 = vmatpush1.xpose.msra.mxu0 0.0
    %221 = vmatprep.subr.mxu0 0.0
    %222 = vmatpush1.xpose.msra.mxu0 0.0
    %223 = vmatprep.subr.mxu0 0.0
    %224 = vmatpush1.xpose.msra.mxu0 0.0
    %225 = vmatprep.subr.mxu0 0.0
    %226 = vmatpush1.xpose.msra.mxu0 0.0
    %227 = vmatprep.subr.mxu0 0.0
    %228 = vmatpush1.xpose.msra.mxu0 0.0
    %229 = vmatprep.mubr.f32.mxu0 %v79
    %230 = vmatmul.mubr.f32.gmra.mrb[0].mxu0 %v57
    %v231 = vpop.f32.mrb[0].mxu0
    %v232 = vadd.f32 0.0, %v231
    %v233 = vpop.f32.mrb[0].mxu0
    %234 = vmatprep.mubr.f32.mxu0 %v82
    %235 = vmatmul.mubr.f32.gmra.mrb[0].mxu0 %v59
    %v236 = vpop.f32.mrb[0].mxu0
    %v237 = vadd.f32 0.0, %v236
    %v238 = vpop.f32.mrb[0].mxu0
    %239 = vdwg.mxu0
    %v241 = vsel %vm77, %v66, 0
    %243 = vmatprep.subr.mxu0 %v241
    %244 = vmatpush1.xpose.msra.mxu0 %v65
    %245 = vmatprep.subr.mxu0 0.0
    %246 = vmatpush1.xpose.msra.mxu0 0.0
    %247 = vmatprep.subr.mxu0 0.0
    %248 = vmatpush1.xpose.msra.mxu0 0.0
    %249 = vmatprep.subr.mxu0 0.0
    %250 = vmatpush1.xpose.msra.mxu0 0.0
    %251 = vmatprep.subr.mxu0 0.0
    %252 = vmatpush1.xpose.msra.mxu0 0.0
    %253 = vmatprep.subr.mxu0 0.0
    %254 = vmatpush1.xpose.msra.mxu0 0.0
    %255 = vmatprep.subr.mxu0 0.0
    %256 = vmatpush1.xpose.msra.mxu0 0.0
    %257 = vmatprep.subr.mxu0 0.0
    %258 = vmatpush1.xpose.msra.mxu0 0.0
    %259 = vmatprep.subr.mxu0 0.0
    %260 = vmatpush1.xpose.msra.mxu0 0.0
    %261 = vmatprep.subr.mxu0 0.0
    %262 = vmatpush1.xpose.msra.mxu0 0.0
    %263 = vmatprep.subr.mxu0 0.0
    %264 = vmatpush1.xpose.msra.mxu0 0.0
    %265 = vmatprep.subr.mxu0 0.0
    %266 = vmatpush1.xpose.msra.mxu0 0.0
    %267 = vmatprep.subr.mxu0 0.0
    %268 = vmatpush1.xpose.msra.mxu0 0.0
    %269 = vmatprep.subr.mxu0 0.0
    %270 = vmatpush1.xpose.msra.mxu0 0.0
    %271 = vmatprep.subr.mxu0 0.0
    %272 = vmatpush1.xpose.msra.mxu0 0.0
    %273 = vmatprep.subr.mxu0 0.0
    %274 = vmatpush1.xpose.msra.mxu0 0.0
    %275 = vmatprep.subr.mxu0 0.0
    %276 = vmatpush1.xpose.msra.mxu0 0.0
    %277 = vmatprep.subr.mxu0 0.0
    %278 = vmatpush1.xpose.msra.mxu0 0.0
    %279 = vmatprep.subr.mxu0 0.0
    %280 = vmatpush1.xpose.msra.mxu0 0.0
    %281 = vmatprep.subr.mxu0 0.0
    %282 = vmatpush1.xpose.msra.mxu0 0.0
    %283 = vmatprep.subr.mxu0 0.0
    %284 = vmatpush1.xpose.msra.mxu0 0.0
    %285 = vmatprep.subr.mxu0 0.0
    %286 = vmatpush1.xpose.msra.mxu0 0.0
    %287 = vmatprep.subr.mxu0 0.0
    %288 = vmatpush1.xpose.msra.mxu0 0.0
    %289 = vmatprep.subr.mxu0 0.0
    %290 = vmatpush1.xpose.msra.mxu0 0.0
    %291 = vmatprep.subr.mxu0 0.0
    %292 = vmatpush1.xpose.msra.mxu0 0.0
    %293 = vmatprep.subr.mxu0 0.0
    %294 = vmatpush1.xpose.msra.mxu0 0.0
    %295 = vmatprep.subr.mxu0 0.0
    %296 = vmatpush1.xpose.msra.mxu0 0.0
    %297 = vmatprep.subr.mxu0 0.0
    %298 = vmatpush1.xpose.msra.mxu0 0.0
    %299 = vmatprep.subr.mxu0 0.0
    %300 = vmatpush1.xpose.msra.mxu0 0.0
    %301 = vmatprep.subr.mxu0 0.0
    %302 = vmatpush1.xpose.msra.mxu0 0.0
    %303 = vmatprep.subr.mxu0 0.0
    %304 = vmatpush1.xpose.msra.mxu0 0.0
    %305 = vmatprep.subr.mxu0 0.0
    %306 = vmatpush1.xpose.msra.mxu0 0.0
    %307 = vmatprep.mubr.f32.mxu0 %v79
    %308 = vmatmul.mubr.f32.gmra.mrb[0].mxu0 %v57
    %v309 = vpop.f32.mrb[0].mxu0
    %v310 = vadd.f32 0.0, %v309
    %v311 = vpop.f32.mrb[0].mxu0
    %312 = vmatprep.mubr.f32.mxu0 %v82
    %313 = vmatmul.mubr.f32.gmra.mrb[0].mxu0 %v59
    %v314 = vpop.f32.mrb[0].mxu0
    %v315 = vadd.f32 0.0, %v314
    %v316 = vpop.f32.mrb[0].mxu0
    %317 = vdwg.mxu0
    %v319 = vsel %vm77, %v68, 0
    %321 = vmatprep.subr.mxu0 %v319
    %322 = vmatpush1.xpose.msra.mxu0 %v67
    %323 = vmatprep.subr.mxu0 0.0
    %324 = vmatpush1.xpose.msra.mxu0 0.0
    %325 = vmatprep.subr.mxu0 0.0
    %326 = vmatpush1.xpose.msra.mxu0 0.0
    %327 = vmatprep.subr.mxu0 0.0
    %328 = vmatpush1.xpose.msra.mxu0 0.0
    %329 = vmatprep.subr.mxu0 0.0
    %330 = vmatpush1.xpose.msra.mxu0 0.0
    %331 = vmatprep.subr.mxu0 0.0
    %332 = vmatpush1.xpose.msra.mxu0 0.0
    %333 = vmatprep.subr.mxu0 0.0
    %334 = vmatpush1.xpose.msra.mxu0 0.0
    %335 = vmatprep.subr.mxu0 0.0
    %336 = vmatpush1.xpose.msra.mxu0 0.0
    %337 = vmatprep.subr.mxu0 0.0
    %338 = vmatpush1.xpose.msra.mxu0 0.0
    %339 = vmatprep.subr.mxu0 0.0
    %340 = vmatpush1.xpose.msra.mxu0 0.0
    %341 = vmatprep.subr.mxu0 0.0
    %342 = vmatpush1.xpose.msra.mxu0 0.0
    %343 = vmatprep.subr.mxu0 0.0
    %344 = vmatpush1.xpose.msra.mxu0 0.0
    %345 = vmatprep.subr.mxu0 0.0
    %346 = vmatpush1.xpose.msra.mxu0 0.0
    %347 = vmatprep.subr.mxu0 0.0
    %348 = vmatpush1.xpose.msra.mxu0 0.0
    %349 = vmatprep.subr.mxu0 0.0
    %350 = vmatpush1.xpose.msra.mxu0 0.0
    %351 = vmatprep.subr.mxu0 0.0
    %352 = vmatpush1.xpose.msra.mxu0 0.0
    %353 = vmatprep.subr.mxu0 0.0
    %354 = vmatpush1.xpose.msra.mxu0 0.0
    %355 = vmatprep.subr.mxu0 0.0
    %356 = vmatpush1.xpose.msra.mxu0 0.0
    %357 = vmatprep.subr.mxu0 0.0
    %358 = vmatpush1.xpose.msra.mxu0 0.0
    %359 = vmatprep.subr.mxu0 0.0
    %360 = vmatpush1.xpose.msra.mxu0 0.0
    %361 = vmatprep.subr.mxu0 0.0
    %362 = vmatpush1.xpose.msra.mxu0 0.0
    %363 = vmatprep.subr.mxu0 0.0
    %364 = vmatpush1.xpose.msra.mxu0 0.0
    %365 = vmatprep.subr.mxu0 0.0
    %366 = vmatpush1.xpose.msra.mxu0 0.0
    %367 = vmatprep.subr.mxu0 0.0
    %368 = vmatpush1.xpose.msra.mxu0 0.0
    %369 = vmatprep.subr.mxu0 0.0
    %370 = vmatpush1.xpose.msra.mxu0 0.0
    %371 = vmatprep.subr.mxu0 0.0
    %372 = vmatpush1.xpose.msra.mxu0 0.0
    %373 = vmatprep.subr.mxu0 0.0
    %374 = vmatpush1.xpose.msra.mxu0 0.0
    %375 = vmatprep.subr.mxu0 0.0
    %376 = vmatpush1.xpose.msra.mxu0 0.0
    %377 = vmatprep.subr.mxu0 0.0
    %378 = vmatpush1.xpose.msra.mxu0 0.0
    %379 = vmatprep.subr.mxu0 0.0
    %380 = vmatpush1.xpose.msra.mxu0 0.0
    %381 = vmatprep.subr.mxu0 0.0
    %382 = vmatpush1.xpose.msra.mxu0 0.0
    %383 = vmatprep.subr.mxu0 0.0
    %384 = vmatpush1.xpose.msra.mxu0 0.0
    %385 = vmatprep.mubr.f32.mxu0 %v79
    %386 = vmatmul.mubr.f32.gmra.mrb[0].mxu0 %v57
    %v387 = vpop.f32.mrb[0].mxu0
    %v388 = vadd.f32 0.0, %v387
    %v389 = vpop.f32.mrb[0].mxu0
    %390 = vmatprep.mubr.f32.mxu0 %v82
    %391 = vmatmul.mubr.f32.gmra.mrb[0].mxu0 %v59
    %v392 = vpop.f32.mrb[0].mxu0
    %v393 = vadd.f32 0.0, %v392
    %v394 = vpop.f32.mrb[0].mxu0
    %395 = vdwg.mxu0
    %v397 = vsel %vm77, %v70, 0
    %399 = vmatprep.subr.mxu0 %v397
    %400 = vmatpush1.xpose.msra.mxu0 %v69
    %401 = vmatprep.subr.mxu0 0.0
    %402 = vmatpush1.xpose.msra.mxu0 0.0
    %403 = vmatprep.subr.mxu0 0.0
    %404 = vmatpush1.xpose.msra.mxu0 0.0
    %405 = vmatprep.subr.mxu0 0.0
    %406 = vmatpush1.xpose.msra.mxu0 0.0
    %407 = vmatprep.subr.mxu0 0.0
    %408 = vmatpush1.xpose.msra.mxu0 0.0
    %409 = vmatprep.subr.mxu0 0.0
    %410 = vmatpush1.xpose.msra.mxu0 0.0
    %411 = vmatprep.subr.mxu0 0.0
    %412 = vmatpush1.xpose.msra.mxu0 0.0
    %413 = vmatprep.subr.mxu0 0.0
    %414 = vmatpush1.xpose.msra.mxu0 0.0
    %415 = vmatprep.subr.mxu0 0.0
    %416 = vmatpush1.xpose.msra.mxu0 0.0
    %417 = vmatprep.subr.mxu0 0.0
    %418 = vmatpush1.xpose.msra.mxu0 0.0
    %419 = vmatprep.subr.mxu0 0.0
    %420 = vmatpush1.xpose.msra.mxu0 0.0
    %421 = vmatprep.subr.mxu0 0.0
    %422 = vmatpush1.xpose.msra.mxu0 0.0
    %423 = vmatprep.subr.mxu0 0.0
    %424 = vmatpush1.xpose.msra.mxu0 0.0
    %425 = vmatprep.subr.mxu0 0.0
    %426 = vmatpush1.xpose.msra.mxu0 0.0
    %427 = vmatprep.subr.mxu0 0.0
    %428 = vmatpush1.xpose.msra.mxu0 0.0
    %429 = vmatprep.subr.mxu0 0.0
    %430 = vmatpush1.xpose.msra.mxu0 0.0
    %431 = vmatprep.subr.mxu0 0.0
    %432 = vmatpush1.xpose.msra.mxu0 0.0
    %433 = vmatprep.subr.mxu0 0.0
    %434 = vmatpush1.xpose.msra.mxu0 0.0
    %435 = vmatprep.subr.mxu0 0.0
    %436 = vmatpush1.xpose.msra.mxu0 0.0
    %437 = vmatprep.subr.mxu0 0.0
    %438 = vmatpush1.xpose.msra.mxu0 0.0
    %439 = vmatprep.subr.mxu0 0.0
    %440 = vmatpush1.xpose.msra.mxu0 0.0
    %441 = vmatprep.subr.mxu0 0.0
    %442 = vmatpush1.xpose.msra.mxu0 0.0
    %443 = vmatprep.subr.mxu0 0.0
    %444 = vmatpush1.xpose.msra.mxu0 0.0
    %445 = vmatprep.subr.mxu0 0.0
    %446 = vmatpush1.xpose.msra.mxu0 0.0
    %447 = vmatprep.subr.mxu0 0.0
    %448 = vmatpush1.xpose.msra.mxu0 0.0
    %449 = vmatprep.subr.mxu0 0.0
    %450 = vmatpush1.xpose.msra.mxu0 0.0
    %451 = vmatprep.subr.mxu0 0.0
    %452 = vmatpush1.xpose.msra.mxu0 0.0
    %453 = vmatprep.subr.mxu0 0.0
    %454 = vmatpush1.xpose.msra.mxu0 0.0
    %455 = vmatprep.subr.mxu0 0.0
    %456 = vmatpush1.xpose.msra.mxu0 0.0
    %457 = vmatprep.subr.mxu0 0.0
    %458 = vmatpush1.xpose.msra.mxu0 0.0
    %459 = vmatprep.subr.mxu0 0.0
    %460 = vmatpush1.xpose.msra.mxu0 0.0
    %461 = vmatprep.subr.mxu0 0.0
    %462 = vmatpush1.xpose.msra.mxu0 0.0
    %463 = vmatprep.mubr.f32.mxu0 %v79
    %464 = vmatmul.mubr.f32.gmra.mrb[0].mxu0 %v57
    %v465 = vpop.f32.mrb[0].mxu0
    %v466 = vadd.f32 0.0, %v465
    %v467 = vpop.f32.mrb[0].mxu0
    %468 = vmatprep.mubr.f32.mxu0 %v82
    %469 = vmatmul.mubr.f32.gmra.mrb[0].mxu0 %v59
    %v470 = vpop.f32.mrb[0].mxu0
    %v471 = vadd.f32 0.0, %v470
    %v472 = vpop.f32.mrb[0].mxu0
    %473 = vdwg.mxu0
    %v475 = vsel %vm77, %v72, 0
    %477 = vmatprep.subr.mxu0 %v475
    %478 = vmatpush1.xpose.msra.mxu0 %v71
    %479 = vmatprep.subr.mxu0 0.0
    %480 = vmatpush1.xpose.msra.mxu0 0.0
    %481 = vmatprep.subr.mxu0 0.0
    %482 = vmatpush1.xpose.msra.mxu0 0.0
    %483 = vmatprep.subr.mxu0 0.0
    %484 = vmatpush1.xpose.msra.mxu0 0.0
    %485 = vmatprep.subr.mxu0 0.0
    %486 = vmatpush1.xpose.msra.mxu0 0.0
    %487 = vmatprep.subr.mxu0 0.0
    %488 = vmatpush1.xpose.msra.mxu0 0.0
    %489 = vmatprep.subr.mxu0 0.0
    %490 = vmatpush1.xpose.msra.mxu0 0.0
    %491 = vmatprep.subr.mxu0 0.0
    %492 = vmatpush1.xpose.msra.mxu0 0.0
    %493 = vmatprep.subr.mxu0 0.0
    %494 = vmatpush1.xpose.msra.mxu0 0.0
    %495 = vmatprep.subr.mxu0 0.0
    %496 = vmatpush1.xpose.msra.mxu0 0.0
    %497 = vmatprep.subr.mxu0 0.0
    %498 = vmatpush1.xpose.msra.mxu0 0.0
    %499 = vmatprep.subr.mxu0 0.0
    %500 = vmatpush1.xpose.msra.mxu0 0.0
    %501 = vmatprep.subr.mxu0 0.0
    %502 = vmatpush1.xpose.msra.mxu0 0.0
    %503 = vmatprep.subr.mxu0 0.0
    %504 = vmatpush1.xpose.msra.mxu0 0.0
    %505 = vmatprep.subr.mxu0 0.0
    %506 = vmatpush1.xpose.msra.mxu0 0.0
    %507 = vmatprep.subr.mxu0 0.0
    %508 = vmatpush1.xpose.msra.mxu0 0.0
    %509 = vmatprep.subr.mxu0 0.0
    %510 = vmatpush1.xpose.msra.mxu0 0.0
    %511 = vmatprep.subr.mxu0 0.0
    %512 = vmatpush1.xpose.msra.mxu0 0.0
    %513 = vmatprep.subr.mxu0 0.0
    %514 = vmatpush1.xpose.msra.mxu0 0.0
    %515 = vmatprep.subr.mxu0 0.0
    %516 = vmatpush1.xpose.msra.mxu0 0.0
    %517 = vmatprep.subr.mxu0 0.0
    %518 = vmatpush1.xpose.msra.mxu0 0.0
    %519 = vmatprep.subr.mxu0 0.0
    %520 = vmatpush1.xpose.msra.mxu0 0.0
    %521 = vmatprep.subr.mxu0 0.0
    %522 = vmatpush1.xpose.msra.mxu0 0.0
    %523 = vmatprep.subr.mxu0 0.0
    %524 = vmatpush1.xpose.msra.mxu0 0.0
    %525 = vmatprep.subr.mxu0 0.0
    %526 = vmatpush1.xpose.msra.mxu0 0.0
    %527 = vmatprep.subr.mxu0 0.0
    %528 = vmatpush1.xpose.msra.mxu0 0.0
    %529 = vmatprep.subr.mxu0 0.0
    %530 = vmatpush1.xpose.msra.mxu0 0.0
    %531 = vmatprep.subr.mxu0 0.0
    %532 = vmatpush1.xpose.msra.mxu0 0.0
    %533 = vmatprep.subr.mxu0 0.0
    %534 = vmatpush1.xpose.msra.mxu0 0.0
    %535 = vmatprep.subr.mxu0 0.0
    %536 = vmatpush1.xpose.msra.mxu0 0.0
    %537 = vmatprep.subr.mxu0 0.0
    %538 = vmatpush1.xpose.msra.mxu0 0.0
    %539 = vmatprep.subr.mxu0 0.0
    %540 = vmatpush1.xpose.msra.mxu0 0.0
    %541 = vmatprep.mubr.f32.mxu0 %v79
    %542 = vmatmul.mubr.f32.gmra.mrb[0].mxu0 %v57
    %v543 = vpop.f32.mrb[0].mxu0
    %v544 = vadd.f32 0.0, %v543
    %v545 = vpop.f32.mrb[0].mxu0
    %546 = vmatprep.mubr.f32.mxu0 %v82
    %547 = vmatmul.mubr.f32.gmra.mrb[0].mxu0 %v59
    %v548 = vpop.f32.mrb[0].mxu0
    %v549 = vadd.f32 0.0, %v548
    %v550 = vpop.f32.mrb[0].mxu0
    %551 = vdwg.mxu0
    %v553 = vsel %vm77, %v74, 0
    %555 = vmatprep.subr.mxu0 %v553
    %556 = vmatpush1.xpose.msra.mxu0 %v73
    %557 = vmatprep.subr.mxu0 0.0
    %558 = vmatpush1.xpose.msra.mxu0 0.0
    %559 = vmatprep.subr.mxu0 0.0
    %560 = vmatpush1.xpose.msra.mxu0 0.0
    %561 = vmatprep.subr.mxu0 0.0
    %562 = vmatpush1.xpose.msra.mxu0 0.0
    %563 = vmatprep.subr.mxu0 0.0
    %564 = vmatpush1.xpose.msra.mxu0 0.0
    %565 = vmatprep.subr.mxu0 0.0
    %566 = vmatpush1.xpose.msra.mxu0 0.0
    %567 = vmatprep.subr.mxu0 0.0
    %568 = vmatpush1.xpose.msra.mxu0 0.0
    %569 = vmatprep.subr.mxu0 0.0
    %570 = vmatpush1.xpose.msra.mxu0 0.0
    %571 = vmatprep.subr.mxu0 0.0
    %572 = vmatpush1.xpose.msra.mxu0 0.0
    %573 = vmatprep.subr.mxu0 0.0
    %574 = vmatpush1.xpose.msra.mxu0 0.0
    %575 = vmatprep.subr.mxu0 0.0
    %576 = vmatpush1.xpose.msra.mxu0 0.0
    %577 = vmatprep.subr.mxu0 0.0
    %578 = vmatpush1.xpose.msra.mxu0 0.0
    %579 = vmatprep.subr.mxu0 0.0
    %580 = vmatpush1.xpose.msra.mxu0 0.0
    %581 = vmatprep.subr.mxu0 0.0
    %582 = vmatpush1.xpose.msra.mxu0 0.0
    %583 = vmatprep.subr.mxu0 0.0
    %584 = vmatpush1.xpose.msra.mxu0 0.0
    %585 = vmatprep.subr.mxu0 0.0
    %586 = vmatpush1.xpose.msra.mxu0 0.0
    %587 = vmatprep.subr.mxu0 0.0
    %588 = vmatpush1.xpose.msra.mxu0 0.0
    %589 = vmatprep.subr.mxu0 0.0
    %590 = vmatpush1.xpose.msra.mxu0 0.0
    %591 = vmatprep.subr.mxu0 0.0
    %592 = vmatpush1.xpose.msra.mxu0 0.0
    %593 = vmatprep.subr.mxu0 0.0
    %594 = vmatpush1.xpose.msra.mxu0 0.0
    %595 = vmatprep.subr.mxu0 0.0
    %596 = vmatpush1.xpose.msra.mxu0 0.0
    %597 = vmatprep.subr.mxu0 0.0
    %598 = vmatpush1.xpose.msra.mxu0 0.0
    %599 = vmatprep.subr.mxu0 0.0
    %600 = vmatpush1.xpose.msra.mxu0 0.0
    %601 = vmatprep.subr.mxu0 0.0
    %602 = vmatpush1.xpose.msra.mxu0 0.0
    %603 = vmatprep.subr.mxu0 0.0
    %604 = vmatpush1.xpose.msra.mxu0 0.0
    %605 = vmatprep.subr.mxu0 0.0
    %606 = vmatpush1.xpose.msra.mxu0 0.0
    %607 = vmatprep.subr.mxu0 0.0
    %608 = vmatpush1.xpose.msra.mxu0 0.0
    %609 = vmatprep.subr.mxu0 0.0
    %610 = vmatpush1.xpose.msra.mxu0 0.0
    %611 = vmatprep.subr.mxu0 0.0
    %612 = vmatpush1.xpose.msra.mxu0 0.0
    %613 = vmatprep.subr.mxu0 0.0
    %614 = vmatpush1.xpose.msra.mxu0 0.0
    %615 = vmatprep.subr.mxu0 0.0
    %616 = vmatpush1.xpose.msra.mxu0 0.0
    %617 = vmatprep.subr.mxu0 0.0
    %618 = vmatpush1.xpose.msra.mxu0 0.0
    %619 = vmatprep.mubr.f32.mxu0 %v79
    %620 = vmatmul.mubr.f32.gmra.mrb[0].mxu0 %v57
    %v621 = vpop.f32.mrb[0].mxu0
    %v622 = vadd.f32 0.0, %v621
    %v623 = vpop.f32.mrb[0].mxu0
    %624 = vmatprep.mubr.f32.mxu0 %v82
    %625 = vmatmul.mubr.f32.gmra.mrb[0].mxu0 %v59
    %v626 = vpop.f32.mrb[0].mxu0
    %v627 = vadd.f32 0.0, %v626
    %v628 = vpop.f32.mrb[0].mxu0
    %629 = vdwg.mxu0
    %v631 = vsel %vm77, %v76, 0
    %633 = vmatprep.subr.mxu0 %v631
    %634 = vmatpush1.xpose.msra.mxu0 %v75
    %635 = vmatprep.subr.mxu0 0.0
    %636 = vmatpush1.xpose.msra.mxu0 0.0
    %637 = vmatprep.subr.mxu0 0.0
    %638 = vmatpush1.xpose.msra.mxu0 0.0
    %639 = vmatprep.subr.mxu0 0.0
    %640 = vmatpush1.xpose.msra.mxu0 0.0
    %641 = vmatprep.subr.mxu0 0.0
    %642 = vmatpush1.xpose.msra.mxu0 0.0
    %643 = vmatprep.subr.mxu0 0.0
    %644 = vmatpush1.xpose.msra.mxu0 0.0
    %645 = vmatprep.subr.mxu0 0.0
    %646 = vmatpush1.xpose.msra.mxu0 0.0
    %647 = vmatprep.subr.mxu0 0.0
    %648 = vmatpush1.xpose.msra.mxu0 0.0
    %649 = vmatprep.subr.mxu0 0.0
    %650 = vmatpush1.xpose.msra.mxu0 0.0
    %651 = vmatprep.subr.mxu0 0.0
    %652 = vmatpush1.xpose.msra.mxu0 0.0
    %653 = vmatprep.subr.mxu0 0.0
    %654 = vmatpush1.xpose.msra.mxu0 0.0
    %655 = vmatprep.subr.mxu0 0.0
    %656 = vmatpush1.xpose.msra.mxu0 0.0
    %657 = vmatprep.subr.mxu0 0.0
    %658 = vmatpush1.xpose.msra.mxu0 0.0
    %659 = vmatprep.subr.mxu0 0.0
    %660 = vmatpush1.xpose.msra.mxu0 0.0
    %661 = vmatprep.subr.mxu0 0.0
    %662 = vmatpush1.xpose.msra.mxu0 0.0
    %663 = vmatprep.subr.mxu0 0.0
    %664 = vmatpush1.xpose.msra.mxu0 0.0
    %665 = vmatprep.subr.mxu0 0.0
    %666 = vmatpush1.xpose.msra.mxu0 0.0
    %667 = vmatprep.subr.mxu0 0.0
    %668 = vmatpush1.xpose.msra.mxu0 0.0
    %669 = vmatprep.subr.mxu0 0.0
    %670 = vmatpush1.xpose.msra.mxu0 0.0
    %671 = vmatprep.subr.mxu0 0.0
    %672 = vmatpush1.xpose.msra.mxu0 0.0
    %673 = vmatprep.subr.mxu0 0.0
    %674 = vmatpush1.xpose.msra.mxu0 0.0
    %675 = vmatprep.subr.mxu0 0.0
    %676 = vmatpush1.xpose.msra.mxu0 0.0
    %677 = vmatprep.subr.mxu0 0.0
    %678 = vmatpush1.xpose.msra.mxu0 0.0
    %679 = vmatprep.subr.mxu0 0.0
    %680 = vmatpush1.xpose.msra.mxu0 0.0
    %681 = vmatprep.subr.mxu0 0.0
    %682 = vmatpush1.xpose.msra.mxu0 0.0
    %683 = vmatprep.subr.mxu0 0.0
    %684 = vmatpush1.xpose.msra.mxu0 0.0
    %685 = vmatprep.subr.mxu0 0.0
    %686 = vmatpush1.xpose.msra.mxu0 0.0
    %687 = vmatprep.subr.mxu0 0.0
    %688 = vmatpush1.xpose.msra.mxu0 0.0
    %689 = vmatprep.subr.mxu0 0.0
    %690 = vmatpush1.xpose.msra.mxu0 0.0
    %691 = vmatprep.subr.mxu0 0.0
    %692 = vmatpush1.xpose.msra.mxu0 0.0
    %693 = vmatprep.subr.mxu0 0.0
    %694 = vmatpush1.xpose.msra.mxu0 0.0
    %695 = vmatprep.subr.mxu0 0.0
    %696 = vmatpush1.xpose.msra.mxu0 0.0
    %697 = vmatprep.mubr.f32.mxu0 %v79
    %698 = vmatmul.mubr.f32.gmra.mrb[0].mxu0 %v57
    %v699 = vpop.f32.mrb[0].mxu0
    %v700 = vadd.f32 0.0, %v699
    %v701 = vpop.f32.mrb[0].mxu0
    %702 = vmatprep.mubr.f32.mxu0 %v82
    %703 = vmatmul.mubr.f32.gmra.mrb[0].mxu0 %v59
    %v704 = vpop.f32.mrb[0].mxu0
    %v705 = vadd.f32 0.0, %v704
    %v706 = vpop.f32.mrb[0].mxu0
    %707 = vdwg.mxu0
    %v708 = vld [vmem:[#allocation7] sm:$0xff]
    %v709 = vld [vmem:[%s3] sm:$0x1]
    %v711 = vlaneseq
    %v712 = vshrl.u32 %v711, 7
    %v713 = vsub.s32 0, %v712
    %v714 = vrot.slane %v709, %v713
    %vm716 = vcmask 64512
    %v718 = vsel %vm716, %v154, 0
    %v721 = vsel %vm716, %v159, 0
    %v724 = vsel %vm716, %v232, 0
    %v727 = vsel %vm716, %v237, 0
    %v730 = vsel %vm716, %v310, 0
    %v733 = vsel %vm716, %v315, 0
    %v736 = vsel %vm716, %v388, 0
    %v739 = vsel %vm716, %v393, 0
    %v742 = vsel %vm716, %v466, 0
    %v745 = vsel %vm716, %v471, 0
    %v748 = vsel %vm716, %v544, 0
    %v751 = vsel %vm716, %v549, 0
    %v754 = vsel %vm716, %v622, 0
    %v757 = vsel %vm716, %v627, 0
    %v760 = vsel %vm716, %v700, 0
    %v763 = vsel %vm716, %v705, 0
    %765 = vmatprep.subr.mxu0 0.0
    %766 = vmatpush1.msra.mxu0 %v708
    %767 = vmatprep.subr.mxu0 0.0
    %768 = vmatpush1.msra.mxu0 0.0
    %769 = vmatprep.subr.mxu0 0.0
    %770 = vmatpush1.msra.mxu0 0.0
    %771 = vmatprep.subr.mxu0 0.0
    %772 = vmatpush1.msra.mxu0 0.0
    %773 = vmatprep.subr.mxu0 0.0
    %774 = vmatpush1.msra.mxu0 0.0
    %775 = vmatprep.subr.mxu0 0.0
    %776 = vmatpush1.msra.mxu0 0.0
    %777 = vmatprep.subr.mxu0 0.0
    %778 = vmatpush1.msra.mxu0 0.0
    %779 = vmatprep.subr.mxu0 0.0
    %780 = vmatpush1.msra.mxu0 0.0
    %781 = vmatprep.subr.mxu0 0.0
    %782 = vmatpush1.msra.mxu0 0.0
    %783 = vmatprep.subr.mxu0 0.0
    %784 = vmatpush1.msra.mxu0 0.0
    %785 = vmatprep.subr.mxu0 0.0
    %786 = vmatpush1.msra.mxu0 0.0
    %787 = vmatprep.subr.mxu0 0.0
    %788 = vmatpush1.msra.mxu0 0.0
    %789 = vmatprep.subr.mxu0 0.0
    %790 = vmatpush1.msra.mxu0 0.0
    %791 = vmatprep.subr.mxu0 0.0
    %792 = vmatpush1.msra.mxu0 0.0
    %793 = vmatprep.subr.mxu0 0.0
    %794 = vmatpush1.msra.mxu0 0.0
    %795 = vmatprep.subr.mxu0 0.0
    %796 = vmatpush1.msra.mxu0 0.0
    %797 = vmatprep.subr.mxu0 0.0
    %798 = vmatpush1.msra.mxu0 0.0
    %799 = vmatprep.subr.mxu0 0.0
    %800 = vmatpush1.msra.mxu0 0.0
    %801 = vmatprep.subr.mxu0 0.0
    %802 = vmatpush1.msra.mxu0 0.0
    %803 = vmatprep.subr.mxu0 0.0
    %804 = vmatpush1.msra.mxu0 0.0
    %805 = vmatprep.subr.mxu0 0.0
    %806 = vmatpush1.msra.mxu0 0.0
    %807 = vmatprep.subr.mxu0 0.0
    %808 = vmatpush1.msra.mxu0 0.0
    %809 = vmatprep.subr.mxu0 0.0
    %810 = vmatpush1.msra.mxu0 0.0
    %811 = vmatprep.subr.mxu0 0.0
    %812 = vmatpush1.msra.mxu0 0.0
    %813 = vmatprep.subr.mxu0 0.0
    %814 = vmatpush1.msra.mxu0 0.0
    %815 = vmatprep.subr.mxu0 0.0
    %816 = vmatpush1.msra.mxu0 0.0
    %817 = vmatprep.subr.mxu0 0.0
    %818 = vmatpush1.msra.mxu0 0.0
    %819 = vmatprep.subr.mxu0 0.0
    %820 = vmatpush1.msra.mxu0 0.0
    %821 = vmatprep.subr.mxu0 0.0
    %822 = vmatpush1.msra.mxu0 0.0
    %823 = vmatprep.subr.mxu0 0.0
    %824 = vmatpush1.msra.mxu0 0.0
    %825 = vmatprep.subr.mxu0 0.0
    %826 = vmatpush1.msra.mxu0 0.0
    %827 = vmatprep.subr.mxu0 0.0
    %828 = vmatpush1.msra.mxu0 0.0
    %829 = vmatprep.mubr.f32.mxu0 0.0
    %830 = vmatmul.mubr.f32.gmra.mrb[0].mxu0 %v718
    %v831 = vpop.f32.mrb[0].mxu0
    %v832 = vadd.f32 %v714, %v831
    %v833 = vpop.f32.mrb[0].mxu0
    %834 = vmatprep.mubr.f32.mxu0 0.0
    %835 = vmatmul.mubr.f32.gmra.mrb[0].mxu0 %v721
    %v836 = vpop.f32.mrb[0].mxu0
    %v837 = vadd.f32 %v714, %v836
    %v838 = vpop.f32.mrb[0].mxu0
    %839 = vmatprep.mubr.f32.mxu0 0.0
    %840 = vmatmul.mubr.f32.gmra.mrb[0].mxu0 %v724
    %v841 = vpop.f32.mrb[0].mxu0
    %v842 = vadd.f32 %v714, %v841
    %v843 = vpop.f32.mrb[0].mxu0
    %844 = vmatprep.mubr.f32.mxu0 0.0
    %845 = vmatmul.mubr.f32.gmra.mrb[0].mxu0 %v727
    %v846 = vpop.f32.mrb[0].mxu0
    %v847 = vadd.f32 %v714, %v846
    %v848 = vpop.f32.mrb[0].mxu0
    %849 = vmatprep.mubr.f32.mxu0 0.0
    %850 = vmatmul.mubr.f32.gmra.mrb[0].mxu0 %v730
    %v851 = vpop.f32.mrb[0].mxu0
    %v852 = vadd.f32 %v714, %v851
    %v853 = vpop.f32.mrb[0].mxu0
    %854 = vmatprep.mubr.f32.mxu0 0.0
    %855 = vmatmul.mubr.f32.gmra.mrb[0].mxu0 %v733
    %v856 = vpop.f32.mrb[0].mxu0
    %v857 = vadd.f32 %v714, %v856
    %v858 = vpop.f32.mrb[0].mxu0
    %859 = vmatprep.mubr.f32.mxu0 0.0
    %860 = vmatmul.mubr.f32.gmra.mrb[0].mxu0 %v736
    %v861 = vpop.f32.mrb[0].mxu0
    %v862 = vadd.f32 %v714, %v861
    %v863 = vpop.f32.mrb[0].mxu0
    %864 = vmatprep.mubr.f32.mxu0 0.0
    %865 = vmatmul.mubr.f32.gmra.mrb[0].mxu0 %v739
    %v866 = vpop.f32.mrb[0].mxu0
    %v867 = vadd.f32 %v714, %v866
    %v868 = vpop.f32.mrb[0].mxu0
    %869 = vmatprep.mubr.f32.mxu0 0.0
    %870 = vmatmul.mubr.f32.gmra.mrb[0].mxu0 %v742
    %v871 = vpop.f32.mrb[0].mxu0
    %v872 = vadd.f32 %v714, %v871
    %v873 = vpop.f32.mrb[0].mxu0
    %874 = vmatprep.mubr.f32.mxu0 0.0
    %875 = vmatmul.mubr.f32.gmra.mrb[0].mxu0 %v745
    %v876 = vpop.f32.mrb[0].mxu0
    %v877 = vadd.f32 %v714, %v876
    %v878 = vpop.f32.mrb[0].mxu0
    %879 = vmatprep.mubr.f32.mxu0 0.0
    %880 = vmatmul.mubr.f32.gmra.mrb[0].mxu0 %v748
    %v881 = vpop.f32.mrb[0].mxu0
    %v882 = vadd.f32 %v714, %v881
    %v883 = vpop.f32.mrb[0].mxu0
    %884 = vmatprep.mubr.f32.mxu0 0.0
    %885 = vmatmul.mubr.f32.gmra.mrb[0].mxu0 %v751
    %v886 = vpop.f32.mrb[0].mxu0
    %v887 = vadd.f32 %v714, %v886
    %v888 = vpop.f32.mrb[0].mxu0
    %889 = vmatprep.mubr.f32.mxu0 0.0
    %890 = vmatmul.mubr.f32.gmra.mrb[0].mxu0 %v754
    %v891 = vpop.f32.mrb[0].mxu0
    %v892 = vadd.f32 %v714, %v891
    %v893 = vpop.f32.mrb[0].mxu0
    %894 = vmatprep.mubr.f32.mxu0 0.0
    %895 = vmatmul.mubr.f32.gmra.mrb[0].mxu0 %v757
    %v896 = vpop.f32.mrb[0].mxu0
    %v897 = vadd.f32 %v714, %v896
    %v898 = vpop.f32.mrb[0].mxu0
    %899 = vmatprep.mubr.f32.mxu0 0.0
    %900 = vmatmul.mubr.f32.gmra.mrb[0].mxu0 %v760
    %v901 = vpop.f32.mrb[0].mxu0
    %v902 = vadd.f32 %v714, %v901
    %v903 = vpop.f32.mrb[0].mxu0
    %904 = vmatprep.mubr.f32.mxu0 0.0
    %905 = vmatmul.mubr.f32.gmra.mrb[0].mxu0 %v763
    %v906 = vpop.f32.mrb[0].mxu0
    %v907 = vadd.f32 %v714, %v906
    %v908 = vpop.f32.mrb[0].mxu0
    %909 = vdwg.mxu0
    %v910 = vmax.f32 %v832, 0.0
    %v911 = vmax.f32 %v837, 0.0
    %v912 = vmax.f32 %v842, 0.0
    %v913 = vmax.f32 %v847, 0.0
    %v914 = vmax.f32 %v852, 0.0
    %v915 = vmax.f32 %v857, 0.0
    %v916 = vmax.f32 %v862, 0.0
    %v917 = vmax.f32 %v867, 0.0
    %v918 = vmax.f32 %v872, 0.0
    %v919 = vmax.f32 %v877, 0.0
    %v920 = vmax.f32 %v882, 0.0
    %v921 = vmax.f32 %v887, 0.0
    %v922 = vmax.f32 %v892, 0.0
    %v923 = vmax.f32 %v897, 0.0
    %v924 = vmax.f32 %v902, 0.0
    %v925 = vmax.f32 %v907, 0.0
    %v926 = vpack.c.bf16 %v911, %v910
    %v927 = vpack.c.bf16 %v913, %v912
    %v928 = vpack.c.bf16 %v915, %v914
    %v929 = vpack.c.bf16 %v917, %v916
    %v930 = vpack.c.bf16 %v919, %v918
    %v931 = vpack.c.bf16 %v921, %v920
    %v932 = vpack.c.bf16 %v923, %v922
    %v933 = vpack.c.bf16 %v925, %v924
    %v942 = vunpack.c.l.b16 %v926
    %v943 = vunpack.c.h.b16 %v926
    %v944 = vunpack.c.l.b16 %v927
    %v945 = vunpack.c.h.b16 %v927
    %v946 = vunpack.c.l.b16 %v928
    %v947 = vunpack.c.h.b16 %v928
    %v948 = vunpack.c.l.b16 %v929
    %v949 = vunpack.c.h.b16 %v929
    %v950 = vunpack.c.l.b16 %v930
    %v951 = vunpack.c.h.b16 %v930
    %v952 = vunpack.c.l.b16 %v931
    %v953 = vunpack.c.h.b16 %v931
    %v954 = vunpack.c.l.b16 %v932
    %v955 = vunpack.c.h.b16 %v932
    %v956 = vunpack.c.l.b16 %v933
    %v957 = vunpack.c.h.b16 %v933
    %v958 = vpack.c.b16 %v942, %v942
    %v959 = vpack.c.b16 %v943, %v943
    %v960 = vpack.c.b16 %v944, %v944
    %v961 = vpack.c.b16 %v945, %v945
    %v962 = vpack.c.b16 %v946, %v946
    %v963 = vpack.c.b16 %v947, %v947
    %v964 = vpack.c.b16 %v948, %v948
    %v965 = vpack.c.b16 %v949, %v949
    %v966 = vpack.c.b16 %v950, %v950
    %v967 = vpack.c.b16 %v951, %v951
    %v968 = vpack.c.b16 %v952, %v952
    %v969 = vpack.c.b16 %v953, %v953
    %v970 = vpack.c.b16 %v954, %v954
    %v971 = vpack.c.b16 %v955, %v955
    %v972 = vpack.c.b16 %v956, %v956
    %v973 = vpack.c.b16 %v957, %v957
    %990 = vst [vmem:[#allocation8] sm:$0xf] %v958
    %991 = vst [vmem:[#allocation8 + $0x4] sm:$0xf] %v959
    %992 = vst [vmem:[#allocation8 + $0x8] sm:$0xf] %v960
    %993 = vst [vmem:[#allocation8 + $0xc] sm:$0xf] %v961
    %994 = vst [vmem:[#allocation8 + $0x10] sm:$0xf] %v962
    %995 = vst [vmem:[#allocation8 + $0x14] sm:$0xf] %v963
    %996 = vst [vmem:[#allocation8 + $0x18] sm:$0xf] %v964
    %997 = vst [vmem:[#allocation8 + $0x1c] sm:$0xf] %v965
    %998 = vst [vmem:[#allocation8 + $0x20] sm:$0xf] %v966
    %999 = vst [vmem:[#allocation8 + $0x24] sm:$0xf] %v967
    %1000 = vst [vmem:[#allocation8 + $0x28] sm:$0xf] %v968
    %1001 = vst [vmem:[#allocation8 + $0x2c] sm:$0xf] %v969
    %1002 = vst [vmem:[#allocation8 + $0x30] sm:$0xf] %v970
    %1003 = vst [vmem:[#allocation8 + $0x34] sm:$0xf] %v971
    %1004 = vst [vmem:[#allocation8 + $0x38] sm:$0xf] %v972
    %1005 = vst [vmem:[#allocation8 + $0x3c] sm:$0xf] %v973
    // Predicated region
    $region30: #{tpu_custom_call.1} parent=1 // pred_check
      _
    $region31: #{tpu_custom_call.1} parent=1 // pred_check_branch
      %1007 = sbr.rel (0) target = $region33
    $region32: #{tpu_custom_call.1} parent=1 // pred_region
      %s1009 = ssub.s32 1024, 1024
      %1010 = vsyncadd [#allocation4], %s1009
      %s1011 = sshll.u32 [#allocation8], 4
      %s1012 = int_to_ptr.vmem [resolvable:$true] %s1011
      %1017 = dma.vmem_to_hbm [thread:$0]  %s1012, 1024, %s4, [#allocation4], 64, 64, 4
    $region33: #{tpu_custom_call.1} parent=1 // pred_fallthru
      _
    // Predicated region
    $region34: #{tpu_custom_call.1} parent=1 // pred_check
      _
    $region35: #{tpu_custom_call.1} parent=1 // pred_check_branch
      %1019 = sbr.rel (0) target = $region37
    $region36: #{tpu_custom_call.1} parent=1 // pred_region
      %1020 = dma.done [#allocation4], 1024
    $region37: #{tpu_custom_call.1} parent=1 // pred_fallthru
      _
    %1021 = vsyncpa [#allocation3], 1
    %1022 = vsyncpa [#allocation6], 1
    %1023 = vsyncpa [#allocation4], 1

</llo_original>
